<compile_context>
chip_gen: v7x
topology: tpu7x:2x2x1
jax: 0.10.0
libtpu: 0.0.40
codegen_flags: <defaults>
</compile_context>

<pallas_src>
import jax
import jax.numpy as jnp
import numpy as np
from jax import lax
from jax.experimental import pallas as pl
from jax.experimental.pallas import tpu as pltpu


_DMA_WINDOW = 8  # in-flight wte row-gather DMAs per token tile


def _round_up(x, m):
    return ((x + m - 1) // m) * m


def _make_embedding_kernel(toks_per_tile):
    """Builds the kernel for a fixed token-tile size."""
    W = _DMA_WINDOW
    assert toks_per_tile >= W and toks_per_tile % W == 0

    def kernel(tok_ref, pos_ref, wte_hbm, wpe_ref, out_ref, wte_buf, sem):
        # tok_ref / pos_ref : scalar-prefetched (SMEM) flat id arrays
        # wte_hbm           : full wte table, left in HBM (pl.ANY)
        # wpe_ref           : full wpe table, resident in VMEM
        # out_ref           : (TOKS, H) output block
        # wte_buf           : (TOKS, H) VMEM scratch for gathered wte rows
        # sem               : (W,) DMA semaphores (rolling window)
        base = pl.program_id(0) * toks_per_tile

        def issue(s):
            tok = tok_ref[base + s]
            pltpu.make_async_copy(
                wte_hbm.at[pl.ds(tok, 1), :],
                wte_buf.at[pl.ds(s, 1), :],
                sem.at[s % W],
            ).start()

        def wait(s):
            pltpu.make_async_copy(
                wte_hbm.at[pl.ds(0, 1), :],      # src only defines the byte count
                wte_buf.at[pl.ds(s, 1), :],
                sem.at[s % W],
            ).wait()

        # Prime the DMA window: first W row gathers in flight.
        def prime(s, carry):
            issue(s)
            return carry

        lax.fori_loop(0, W, prime, 0)

        # Main loop: wait row s, immediately refill the window with row s+W,
        # then add the resident positional row and write the output row.
        def body(s, carry):
            wait(s)

            @pl.when(s + W < toks_per_tile)
            def _():
                issue(s + W)

            p = pos_ref[base + s]
            out_ref[pl.ds(s, 1), :] = (
                wte_buf[pl.ds(s, 1), :] + wpe_ref[pl.ds(p, 1), :]
            )
            return carry

        lax.fori_loop(0, toks_per_tile, body, 0)

    return kernel


def embedding_forward(input_ids, position_ids, wte, wpe, max_toks_per_tile=256):
    """wte(input_ids) + wpe(position_ids) via a tiled Pallas gather kernel."""
    B, S = input_ids.shape
    V, H = wte.shape
    P, H2 = wpe.shape
    assert H == H2
    assert H % 128 == 0, "hidden size must be a multiple of 128 lanes"
    # TODO(synk): add a lane-padding path for hidden sizes not aligned to 128.

    n_tok = B * S

    # Token-tile size: multiple of 16 sublanes (valid for f32 and bf16), capped
    # by a conservative VMEM budget (gather scratch + double-buffered output).
    bytes_per_row = H * jnp.dtype(wte.dtype).itemsize
    toks = min(max_toks_per_tile, _round_up(n_tok, 16))
    toks = _round_up(toks, 16)
    vmem_budget = 24 * 1024 * 1024  # stays under default scoped limits (v5e/v6e/v7x)
    while toks > 16 and 3 * toks * bytes_per_row > vmem_budget:
        toks = _round_up(toks // 2, 16)

    n_pad = _round_up(n_tok, toks)
    tok_flat = jnp.zeros((n_pad,), jnp.int32).at[:n_tok].set(
        input_ids.reshape(n_tok).astype(jnp.int32))
    pos_flat = jnp.zeros((n_pad,), jnp.int32).at[:n_tok].set(
        position_ids.reshape(n_tok).astype(jnp.int32))

    grid_spec = pltpu.PrefetchScalarGridSpec(
        num_scalar_prefetch=2,
        grid=(n_pad // toks,),
        in_specs=[
            # wte stays in HBM; rows are gathered manually inside the kernel.
            pl.BlockSpec(memory_space=pl.ANY),
            # wpe is small: keep the whole table resident in VMEM.
            pl.BlockSpec((P, H), lambda i, tok, pos: (0, 0)),
        ],
        out_specs=pl.BlockSpec((toks, H), lambda i, tok, pos: (i, 0)),
        scratch_shapes=[
            pltpu.VMEM((toks, H), wte.dtype),
            pltpu.SemaphoreType.DMA((_DMA_WINDOW,)),
        ],
    )

    out_flat = pl.pallas_call(
        _make_embedding_kernel(toks),
        out_shape=jax.ShapeDtypeStruct((n_pad, H), wte.dtype),
        grid_spec=grid_spec,
        compiler_params=pltpu.CompilerParams(
            dimension_semantics=("parallel",)),
    )(tok_flat, pos_flat, wte, wpe)

    return out_flat[:n_tok].reshape(B, S, H)


if __name__ == "__main__":
    # Small synthetic configuration consistent with the module's forward.
    B, S, H = 2, 8, 128      # batch, sequence, hidden size
    VOCAB, MAX_POS = 64, 32  # synthetic wte / wpe table sizes

    key = jax.random.PRNGKey(0)
    k_wte, k_wpe, k_ids = jax.random.split(key, 3)

    # Deterministic synthetic parameters (nn.Embedding weight tables).
    wte = jax.random.normal(k_wte, (VOCAB, H), dtype=jnp.float32) * 0.02
    wpe = jax.random.normal(k_wpe, (MAX_POS, H), dtype=jnp.float32) * 0.02

    # Example inputs (ids assumed in-range; no bounds check inside the kernel).
    input_ids = jax.random.randint(k_ids, (B, S), 0, VOCAB, dtype=jnp.int32)
    position_ids = jnp.broadcast_to(jnp.arange(S, dtype=jnp.int32), (B, S))

    out = embedding_forward(input_ids, position_ids, wte, wpe)
    out = jax.block_until_ready(out)

    # Reference (plain JAX) check of the gather + add semantics.
    ref = wte[input_ids] + wpe[position_ids]
    np.testing.assert_allclose(np.asarray(out), np.asarray(ref), rtol=1e-6, atol=1e-6)

    print("KERNEL_OK")
</pallas_src>

<mosaic_0001>
module attributes {stable_mosaic.version = 11 : i64} {
  func.func @kernel(%arg0: i32, %arg1: memref<16xi32, #tpu.memory_space<smem>>, %arg2: memref<16xi32, #tpu.memory_space<smem>>, %arg3: memref<64x128xf32, #tpu.memory_space<any>>, %arg4: memref<32x128xf32, #tpu.memory_space<vmem>>, %arg5: memref<16x128xf32, #tpu.memory_space<vmem>>, %arg6: memref<16x128xf32, #tpu.memory_space<vmem>>, %arg7: memref<8x!tpu.dma_semaphore, #tpu.memory_space<semaphore_mem>>) attributes {dimension_semantics = [#tpu.dimension_semantics<parallel>], iteration_bounds = array<i64: 1>, scalar_prefetch = 2 : i64, scratch_operands = 2 : i64, tpu.core_type = #tpu.core_type<tc>, window_params = [{}, {pipeline_mode = #tpu.pipeline_mode<synchronous>, transform_indices = @transform_1, window_bounds = array<i64: 32, 128>}, {transform_indices = @transform_2, window_bounds = array<i64: 16, 128>}]} {
    %c16_i32 = arith.constant 16 : i32
    %0 = arith.muli %arg0, %c16_i32 : i32
    %c0_i32 = arith.constant 0 : i32
    %c8_i32 = arith.constant 8 : i32
    %1 = arith.addi %c0_i32, %c8_i32 : i32
    %c1_i32 = arith.constant 1 : i32
    scf.for %arg8 = %c0_i32 to %1 step %c1_i32  : i32 {
      %3 = arith.addi %0, %arg8 : i32
      %4 = arith.index_cast %3 : i32 to index
      %5 = memref.load %arg1[%4] : memref<16xi32, #tpu.memory_space<smem>>
      %c8_i32_5 = arith.constant 8 : i32
      %c0_i32_6 = arith.constant 0 : i32
      %6 = arith.cmpi eq, %c8_i32_5, %c0_i32_6 : i32
      %c1_i32_7 = arith.constant 1 : i32
      %7 = arith.select %6, %c1_i32_7, %c8_i32_5 : i32
      %8 = arith.remsi %arg8, %7 : i32
      %c0_i32_8 = arith.constant 0 : i32
      %9 = arith.cmpi ne, %8, %c0_i32_8 : i32
      %c0_i32_9 = arith.constant 0 : i32
      %10 = arith.cmpi slt, %8, %c0_i32_9 : i32
      %c0_i32_10 = arith.constant 0 : i32
      %11 = arith.cmpi slt, %7, %c0_i32_10 : i32
      %12 = arith.xori %10, %11 : i1
      %13 = arith.andi %12, %9 : i1
      %14 = arith.addi %8, %7 : i32
      %15 = arith.select %13, %14, %8 : i32
      %c0_i32_11 = arith.constant 0 : i32
      %16 = tpu.memref_slice %arg3[%5, %c0_i32_11] : memref<64x128xf32, #tpu.memory_space<any>> -> memref<1x128xf32, #tpu.memory_space<any>>
      %c0_i32_12 = arith.constant 0 : i32
      %17 = tpu.memref_slice %arg6[%arg8, %c0_i32_12] : memref<16x128xf32, #tpu.memory_space<vmem>> -> memref<1x128xf32, #tpu.memory_space<vmem>>
      %18 = tpu.memref_slice %arg7[%15] : memref<8x!tpu.dma_semaphore, #tpu.memory_space<semaphore_mem>> -> memref<1x!tpu.dma_semaphore, #tpu.memory_space<semaphore_mem>>
      %19 = tpu.memref_squeeze %18 : memref<1x!tpu.dma_semaphore, #tpu.memory_space<semaphore_mem>> -> memref<!tpu.dma_semaphore, #tpu.memory_space<semaphore_mem>>
      tpu.enqueue_dma source(%16 : memref<1x128xf32, #tpu.memory_space<any>>) target(%17 : memref<1x128xf32, #tpu.memory_space<vmem>>) target_semaphore(%19 : memref<!tpu.dma_semaphore, #tpu.memory_space<semaphore_mem>>)
    }
    %c8_i32_0 = arith.constant 8 : i32
    %c0_i32_1 = arith.constant 0 : i32
    %c16_i32_2 = arith.constant 16 : i32
    %2 = arith.addi %c0_i32_1, %c16_i32_2 : i32
    %c1_i32_3 = arith.constant 1 : i32
    scf.for %arg8 = %c0_i32_1 to %2 step %c1_i32_3  : i32 {
      %c8_i32_5 = arith.constant 8 : i32
      %c0_i32_6 = arith.constant 0 : i32
      %3 = arith.cmpi eq, %c8_i32_5, %c0_i32_6 : i32
      %c1_i32_7 = arith.constant 1 : i32
      %4 = arith.select %3, %c1_i32_7, %c8_i32_5 : i32
      %5 = arith.remsi %arg8, %4 : i32
      %c0_i32_8 = arith.constant 0 : i32
      %6 = arith.cmpi ne, %5, %c0_i32_8 : i32
      %c0_i32_9 = arith.constant 0 : i32
      %7 = arith.cmpi slt, %5, %c0_i32_9 : i32
      %c0_i32_10 = arith.constant 0 : i32
      %8 = arith.cmpi slt, %4, %c0_i32_10 : i32
      %9 = arith.xori %7, %8 : i1
      %10 = arith.andi %9, %6 : i1
      %11 = arith.addi %5, %4 : i32
      %12 = arith.select %10, %11, %5 : i32
      %c0_i32_11 = arith.constant 0 : i32
      %c0_i32_12 = arith.constant 0 : i32
      %13 = tpu.memref_slice %arg3[%c0_i32_11, %c0_i32_12] : memref<64x128xf32, #tpu.memory_space<any>> -> memref<1x128xf32, #tpu.memory_space<any>>
      %c0_i32_13 = arith.constant 0 : i32
      %14 = tpu.memref_slice %arg6[%arg8, %c0_i32_13] : memref<16x128xf32, #tpu.memory_space<vmem>> -> memref<1x128xf32, #tpu.memory_space<vmem>>
      %15 = tpu.memref_slice %arg7[%12] : memref<8x!tpu.dma_semaphore, #tpu.memory_space<semaphore_mem>> -> memref<1x!tpu.dma_semaphore, #tpu.memory_space<semaphore_mem>>
      %16 = tpu.memref_squeeze %15 : memref<1x!tpu.dma_semaphore, #tpu.memory_space<semaphore_mem>> -> memref<!tpu.dma_semaphore, #tpu.memory_space<semaphore_mem>>
      tpu.wait_dma2 semaphore(%16 : memref<!tpu.dma_semaphore, #tpu.memory_space<semaphore_mem>>) src(%13 : memref<1x128xf32, #tpu.memory_space<any>>) dst(%14 : memref<1x128xf32, #tpu.memory_space<vmem>>)
      %c8_i32_14 = arith.constant 8 : i32
      %17 = arith.addi %arg8, %c8_i32_14 : i32
      %c16_i32_15 = arith.constant 16 : i32
      %18 = arith.cmpi slt, %17, %c16_i32_15 : i32
      %19 = arith.extui %18 : i1 to i32
      %c0_i32_16 = arith.constant 0 : i32
      %20 = arith.cmpi ne, %19, %c0_i32_16 : i32
      scf.if %20 {
        %c8_i32_19 = arith.constant 8 : i32
        %31 = arith.addi %arg8, %c8_i32_19 : i32
        %32 = arith.addi %0, %31 : i32
        %33 = arith.index_cast %32 : i32 to index
        %34 = memref.load %arg1[%33] : memref<16xi32, #tpu.memory_space<smem>>
        %c8_i32_20 = arith.constant 8 : i32
        %c0_i32_21 = arith.constant 0 : i32
        %35 = arith.cmpi eq, %c8_i32_20, %c0_i32_21 : i32
        %c1_i32_22 = arith.constant 1 : i32
        %36 = arith.select %35, %c1_i32_22, %c8_i32_20 : i32
        %37 = arith.remsi %31, %36 : i32
        %c0_i32_23 = arith.constant 0 : i32
        %38 = arith.cmpi ne, %37, %c0_i32_23 : i32
        %c0_i32_24 = arith.constant 0 : i32
        %39 = arith.cmpi slt, %37, %c0_i32_24 : i32
        %c0_i32_25 = arith.constant 0 : i32
        %40 = arith.cmpi slt, %36, %c0_i32_25 : i32
        %41 = arith.xori %39, %40 : i1
        %42 = arith.andi %41, %38 : i1
        %43 = arith.addi %37, %36 : i32
        %44 = arith.select %42, %43, %37 : i32
        %c0_i32_26 = arith.constant 0 : i32
        %45 = tpu.memref_slice %arg3[%34, %c0_i32_26] : memref<64x128xf32, #tpu.memory_space<any>> -> memref<1x128xf32, #tpu.memory_space<any>>
        %c0_i32_27 = arith.constant 0 : i32
        %46 = tpu.memref_slice %arg6[%31, %c0_i32_27] : memref<16x128xf32, #tpu.memory_space<vmem>> -> memref<1x128xf32, #tpu.memory_space<vmem>>
        %47 = tpu.memref_slice %arg7[%44] : memref<8x!tpu.dma_semaphore, #tpu.memory_space<semaphore_mem>> -> memref<1x!tpu.dma_semaphore, #tpu.memory_space<semaphore_mem>>
        %48 = tpu.memref_squeeze %47 : memref<1x!tpu.dma_semaphore, #tpu.memory_space<semaphore_mem>> -> memref<!tpu.dma_semaphore, #tpu.memory_space<semaphore_mem>>
        tpu.enqueue_dma source(%45 : memref<1x128xf32, #tpu.memory_space<any>>) target(%46 : memref<1x128xf32, #tpu.memory_space<vmem>>) target_semaphore(%48 : memref<!tpu.dma_semaphore, #tpu.memory_space<semaphore_mem>>)
      } else {
      }
      %21 = arith.addi %0, %arg8 : i32
      %22 = arith.index_cast %21 : i32 to index
      %23 = memref.load %arg2[%22] : memref<16xi32, #tpu.memory_space<smem>>
      %24 = arith.index_cast %arg8 : i32 to index
      %c0 = arith.constant 0 : index
      %25 = vector.load %arg6[%24, %c0] : memref<16x128xf32, #tpu.memory_space<vmem>>, vector<1x128xf32>
      %26 = arith.index_cast %23 : i32 to index
      %c0_17 = arith.constant 0 : index
      %27 = vector.load %arg4[%26, %c0_17] : memref<32x128xf32, #tpu.memory_space<vmem>>, vector<1x128xf32>
      %28 = arith.addf %25, %27 : vector<1x128xf32>
      %29 = arith.index_cast %arg8 : i32 to index
      %c0_18 = arith.constant 0 : index
      %30 = vector.load %arg5[%29, %c0_18] : memref<16x128xf32, #tpu.memory_space<vmem>>, vector<1x128xf32>
      tpu.vector_store %arg5[%29, %c0_18], %28 {strides = array<i32>} : memref<16x128xf32, #tpu.memory_space<vmem>>, vector<1x128xf32>,
    }
    %c16_i32_4 = arith.constant 16 : i32
    return
  }
  func.func @transform_1(%arg0: i32, %arg1: memref<16xi32, #tpu.memory_space<smem>>, %arg2: memref<16xi32, #tpu.memory_space<smem>>) -> (i32, i32) {
    %c0_i32 = arith.constant 0 : i32
    %c0_i32_0 = arith.constant 0 : i32
    %c0_i32_1 = arith.constant 0 : i32
    return %c0_i32, %c0_i32_0 : i32, i32
  }
  func.func @transform_2(%arg0: i32, %arg1: memref<16xi32, #tpu.memory_space<smem>>, %arg2: memref<16xi32, #tpu.memory_space<smem>>) -> (i32, i32) {
    %c0_i32 = arith.constant 0 : i32
    %c0_i32_0 = arith.constant 0 : i32
    return %arg0, %c0_i32 : i32, i32
  }
}

</mosaic_0001>

<llo_original>
// kernel: tpu_custom_call.1
$region0: #{tpu_custom_call.1}
  #allocation0 [shape = 'u32[]', space=smem, size = 0x4, offset = 0x4, fixed_abs, tag = 'smem constant byte address 0x4 - core index']
  #allocation1 [shape = 'u32[144,128]{1,0:T(1,128)}', space=vmem, size = 0x12000, scoped, tag = 'internal scratch']
  #allocation2 [shape = 'f32[16,128]{1,0:T(8,128)}', space=vmem, size = 0x2000, scoped, tag = 'scratch operand']
  #allocation3 [shape = 's32[8]{0}', space=sflag, size = 0x20, scoped, tag = 'scratch operand']
  #allocation4 [shape = 's32[1]{0}', space=sflag, size = 0x4, scoped, tag = 'scoped memory for tpu_custom_call.1']
  #allocation5 [shape = 'u8[512]{0}', space=smem, size = 0x200, scoped, tag = 'prefetched SMEM operand 0']
  #allocation6 [shape = 'u8[512]{0}', space=smem, size = 0x200, scoped, tag = 'prefetched SMEM operand 1']
  #allocation11 [shape = 's32[]', space=sflag, size = 0x4, offset = 0, fixed_abs, tag = 'sflag constant byte address 0x0 - dummy sync flag']
  #allocation12 [shape = 's32[]', space=sflag, size = 0x4, offset = 0, fixed_abs, tag = 'sflag constant byte address 0x0 - dummy sync flag']
  #allocation13 [shape = 'u32[]', space=smem, size = 0x4, offset = 0x44, fixed_abs, tag = 'smem constant byte address 0x44 - assertion arg 0']
  #allocation14 [shape = 'u32[]', space=smem, size = 0x4, offset = 0x48, fixed_abs, tag = 'smem constant byte address 0x48 - assertion arg 1']
  #allocation15 [shape = 's32[]', space=sflag, size = 0x4, offset = 0, fixed_abs, tag = 'sflag constant byte address 0x0 - dummy sync flag']
  #allocation16 [shape = 's32[]', space=sflag, size = 0x4, offset = 0, fixed_abs, tag = 'sflag constant byte address 0x0 - dummy sync flag']
  %s0 = inlined_call_operand.hbm [shape: s32[16], index: 0, kind: input, shape index: {}]
  %s1 = inlined_call_operand.vmem [shape: s32[16], index: 1, kind: input, shape index: {}]
  %s2 = inlined_call_operand.hbm [shape: f32[64,128], index: 2, kind: input, shape index: {}]
  %s3 = inlined_call_operand.hbm [shape: f32[32,128], index: 3, kind: input, shape index: {}]
  %s4 = inlined_call_operand.hbm [shape: f32[16,128], index: 4, kind: output, shape index: {}]
  %s5 = sld [smem:[#allocation0]]
  $region44: #{tpu_custom_call.1} parent=0
    _
  %s7 = ssub.s32 1, %s5
  %s8 = scalar_select 0, %s7, %s5
  %10 = dma.hbm_to_smem %s0, 16, [#allocation5], [#allocation4]
  %s11 = sshll.u32 %s1, 4
  %s12 = int_to_ptr.vmem [resolvable:$true] %s11
  %14 = dma.vmem_to_smem %s12, 16, [#allocation6], [#allocation4]
  %15 = dma.done [#allocation4], 32
  %16 = sfence
  $region1: #{tpu_custom_call.1} parent=0
    #allocation7 [shape = 'u8[16384]{0}', space=vmem, size = 0x4000, scoped, tag = 'input window, operand 3, single buffered']
    #allocation8 [shape = 's32[1]{0}', space=sflag, size = 0x4, scoped, tag = 'scoped memory for tpu_custom_call.1']
    #allocation9 [shape = 's32[1]{0}', space=sflag, size = 0x4, scoped, tag = 'scoped memory for tpu_custom_call.1']
    #allocation10 [shape = 'u8[8192]{0}', space=vmem, size = 0x2000, scoped, tag = 'output window, operand 0, single buffered']
    %17 = vsyncpa [#allocation8], 0
    %18 = vsyncpa [#allocation9], 0
    // Predicated region
    $region2: #{tpu_custom_call.1} parent=1 // pred_check
      _
    $region3: #{tpu_custom_call.1} parent=1 // pred_check_branch
      %20 = sbr.rel (0) target = $region5
    $region4: #{tpu_custom_call.1} parent=1 // pred_region
      %s22 = ssub.s32 512, 512
      %23 = vsyncadd [#allocation8], %s22
      %s24 = sshll.u32 [#allocation7], 4
      %s25 = int_to_ptr.vmem [resolvable:$true] %s24
      %30 = dma.hbm_to_vmem [thread:$0]  %s3, 512, %s25, [#allocation8], 128, 128, 8
    $region5: #{tpu_custom_call.1} parent=1 // pred_fallthru
      _
    // Predicated region
    $region6: #{tpu_custom_call.1} parent=1 // pred_check
      _
    $region7: #{tpu_custom_call.1} parent=1 // pred_check_branch
      %32 = sbr.rel (0) target = $region9
    $region8: #{tpu_custom_call.1} parent=1 // pred_region
      %33 = dma.done [#allocation8], 512
    $region9: #{tpu_custom_call.1} parent=1 // pred_fallthru
      _
    %s34 = smul.u32 0, 16
    loop: start=0, step=1, limit=8
    $region10: #{tpu_custom_call.1} parent=1 // loop_pre_header
      _
    $region11: #{tpu_custom_call.1} parent=1 // loop_header
      %s36 = sphi 0, %s40
      %p37 = scmp.ge.s32.totalorder %s36, 8
    $region12: #{tpu_custom_call.1} parent=1 // loop_header_branch
      %39 = sbr.rel (%p37) target = $region16
    $region13: #{tpu_custom_call.1} parent=1 // loop_body
      %s41 = sadd.s32 %s34, %s36
      %s42 = sld [smem:[#allocation5 + %s41]]
      %p43 = scmp.lt.s32.totalorder %s36, 0
      %s44 = ssub.s32 0, %s36
      %s45 = scalar_select %p43, %s44, %s36
      %s46 = sand.u32 %s45, 7
      %s47 = ssub.s32 0, %s46
      %s48 = scalar_select %p43, %s47, %s46
      %p49 = scmp.ne.s32.totalorder %s48, 0
      %p50 = scmp.lt.s32.totalorder %s48, 0
      %p51 = pnand %p50, %p49
      %p52 = pneg %p51
      %s53 = sadd.s32 %s48, 8
      %s54 = scalar_select %p52, %s53, %s48
      %s55 = smul.addr %s42, 16
      %s56 = scalar_lea.hbm %s2, %s55
      %s57 = scalar_lea.vmem [#allocation2], %s36
      %s58 = scalar_lea.sflag [#allocation3], %s54
      // Predicated region
      $region17: #{tpu_custom_call.1} parent=13 // pred_check
        _
      $region18: #{tpu_custom_call.1} parent=13 // pred_check_branch
        %60 = sbr.rel target = $region20
      $region19: #{tpu_custom_call.1} parent=13 // pred_region
        %61 = sst [smem:[#allocation13]] [#allocation12]
        %62 = sst [smem:[#allocation14]] [#allocation11]
      $region20: #{tpu_custom_call.1} parent=13 // pred_fallthru
        _
      %64 = shalt.err (0)
      %s66 = sshll.u32 %s57, 4
      %s67 = int_to_ptr.vmem [resolvable:$true] %s66
      %69 = dma.hbm_to_vmem [thread:$0]  %s56, 16, %s67, %s58
    $region14: #{tpu_custom_call.1} parent=1 // loop_footer
      %s40 = sadd.s32 1, %s36
    $region15: #{tpu_custom_call.1} parent=1 // loop_footer_branch
      %35 = sbr.rel target = $region11
    $region16: #{tpu_custom_call.1} parent=1 // loop_exit
      _
    loop: start=0, step=1, limit=16
    $region21: #{tpu_custom_call.1} parent=1 // loop_pre_header
      _
    $region22: #{tpu_custom_call.1} parent=1 // loop_header
      %s71 = sphi 0, %s75
      %p72 = scmp.ge.s32.totalorder %s71, 16
    $region23: #{tpu_custom_call.1} parent=1 // loop_header_branch
      %74 = sbr.rel (%p72) target = $region27
    $region24: #{tpu_custom_call.1} parent=1 // loop_body
      %p76 = scmp.lt.s32.totalorder %s71, 0
      %s77 = ssub.s32 0, %s71
      %s78 = scalar_select %p76, %s77, %s71
      %s79 = sand.u32 %s78, 7
      %s80 = ssub.s32 0, %s79
      %s81 = scalar_select %p76, %s80, %s79
      %p82 = scmp.ne.s32.totalorder %s81, 0
      %p83 = scmp.lt.s32.totalorder %s81, 0
      %p84 = pnand %p83, %p82
      %p85 = pneg %p84
      %s86 = sadd.s32 %s81, 8
      %s87 = scalar_select %p85, %s86, %s81
      %s88 = scalar_lea.vmem [#allocation2], %s71
      %s89 = scalar_lea.sflag [#allocation3], %s87
      %s90 = smul.u32 1, 1
      %s91 = sshll.u32 %s90, 4
      %92 = dma.done %s89, %s91
      %s93 = sadd.s32 %s71, 8
      %p94 = scmp.lt.s32.totalorder %s93, 16
      // Predicated region
      $region28: #{tpu_custom_call.1} parent=24 // pred_check
        %p95 = pneg %p94
      $region29: #{tpu_custom_call.1} parent=24 // pred_check_branch
        %97 = sbr.rel (%p95) target = $region31
      $region30: #{tpu_custom_call.1} parent=24 // pred_region
        %s98 = sadd.s32 %s34, %s93
        %s99 = sld [smem:[#allocation5 + %s98]]
        %p100 = scmp.lt.s32.totalorder %s93, 0
        %s101 = ssub.s32 0, %s93
        %s102 = scalar_select %p100, %s101, %s93
        %s103 = sand.u32 %s102, 7
        %s104 = ssub.s32 0, %s103
        %s105 = scalar_select %p100, %s104, %s103
        %p106 = scmp.ne.s32.totalorder %s105, 0
        %p107 = scmp.lt.s32.totalorder %s105, 0
        %p108 = pnand %p107, %p106
        %p109 = pneg %p108
        %s110 = sadd.s32 %s105, 8
        %s111 = scalar_select %p109, %s110, %s105
        %s112 = smul.addr %s99, 16
        %s113 = scalar_lea.hbm %s2, %s112
        %s114 = scalar_lea.vmem [#allocation2], %s93
        %s115 = scalar_lea.sflag [#allocation3], %s111
        // Predicated region
        $region32: #{tpu_custom_call.1} parent=30 // pred_check
          _
        $region33: #{tpu_custom_call.1} parent=30 // pred_check_branch
          %117 = sbr.rel target = $region35
        $region34: #{tpu_custom_call.1} parent=30 // pred_region
          %118 = sst [smem:[#allocation13]] [#allocation16]
          %119 = sst [smem:[#allocation14]] [#allocation15]
        $region35: #{tpu_custom_call.1} parent=30 // pred_fallthru
          _
        %121 = shalt.err (0)
        %s123 = sshll.u32 %s114, 4
        %s124 = int_to_ptr.vmem [resolvable:$true] %s123
        %126 = dma.hbm_to_vmem [thread:$0]  %s113, 16, %s124, %s115
      $region31: #{tpu_custom_call.1} parent=24 // pred_fallthru
        _
      %s127 = sadd.s32 %s34, %s71
      %s128 = sld [smem:[#allocation6 + %s127]]
      %v129 = vld [vmem:[%s88] sm:$0x1]
      %s130 = scalar_lea.vmem [#allocation7], %s128
      %v131 = vld [vmem:[%s130] sm:$0x1]
      %v132 = vadd.f32 %v129, %v131
      %s133 = scalar_lea.vmem [#allocation10], %s71
      %134 = vst [vmem:[%s133] sm:$0x1] %v132
    $region25: #{tpu_custom_call.1} parent=1 // loop_footer
      %s75 = sadd.s32 1, %s71
    $region26: #{tpu_custom_call.1} parent=1 // loop_footer_branch
      %70 = sbr.rel target = $region22
    $region27: #{tpu_custom_call.1} parent=1 // loop_exit
      _
    // Predicated region
    $region36: #{tpu_custom_call.1} parent=1 // pred_check
      _
    $region37: #{tpu_custom_call.1} parent=1 // pred_check_branch
      %136 = sbr.rel (0) target = $region39
    $region38: #{tpu_custom_call.1} parent=1 // pred_region
      %s138 = ssub.s32 256, 256
      %139 = vsyncadd [#allocation9], %s138
      %s140 = sshll.u32 [#allocation10], 4
      %s141 = int_to_ptr.vmem [resolvable:$true] %s140
      %146 = dma.vmem_to_hbm [thread:$0]  %s141, 256, %s4, [#allocation9], 128, 128, 8
    $region39: #{tpu_custom_call.1} parent=1 // pred_fallthru
      _
    // Predicated region
    $region40: #{tpu_custom_call.1} parent=1 // pred_check
      _
    $region41: #{tpu_custom_call.1} parent=1 // pred_check_branch
      %148 = sbr.rel (0) target = $region43
    $region42: #{tpu_custom_call.1} parent=1 // pred_region
      %149 = dma.done [#allocation9], 256
    $region43: #{tpu_custom_call.1} parent=1 // pred_fallthru
      _
    %150 = vsyncpa [#allocation8], 1
    %151 = vsyncpa [#allocation9], 1
  %152 = vsyncmov [#allocation3]
  %s153 = vpop.sfrf %152
  %p154 = scmp.eq.s32.totalorder %s153, 0
  %p155 = pneg %p154
  %157 = shalt.err (%p155)
  %s158 = scalar_lea.sflag [#allocation3], 1
  %159 = vsyncmov %s158
  %s160 = vpop.sfrf %159
  %p161 = scmp.eq.s32.totalorder %s160, 0
  %p162 = pneg %p161
  %164 = shalt.err (%p162)
  %s165 = scalar_lea.sflag [#allocation3], 2
  %166 = vsyncmov %s165
  %s167 = vpop.sfrf %166
  %p168 = scmp.eq.s32.totalorder %s167, 0
  %p169 = pneg %p168
  %171 = shalt.err (%p169)
  %s172 = scalar_lea.sflag [#allocation3], 3
  %173 = vsyncmov %s172
  %s174 = vpop.sfrf %173
  %p175 = scmp.eq.s32.totalorder %s174, 0
  %p176 = pneg %p175
  %178 = shalt.err (%p176)
  %s179 = scalar_lea.sflag [#allocation3], 4
  %180 = vsyncmov %s179
  %s181 = vpop.sfrf %180
  %p182 = scmp.eq.s32.totalorder %s181, 0
  %p183 = pneg %p182
  %185 = shalt.err (%p183)
  %s186 = scalar_lea.sflag [#allocation3], 5
  %187 = vsyncmov %s186
  %s188 = vpop.sfrf %187
  %p189 = scmp.eq.s32.totalorder %s188, 0
  %p190 = pneg %p189
  %192 = shalt.err (%p190)
  %s193 = scalar_lea.sflag [#allocation3], 6
  %194 = vsyncmov %s193
  %s195 = vpop.sfrf %194
  %p196 = scmp.eq.s32.totalorder %s195, 0
  %p197 = pneg %p196
  %199 = shalt.err (%p197)
  %s200 = scalar_lea.sflag [#allocation3], 7
  %201 = vsyncmov %s200
  %s202 = vpop.sfrf %201
  %p203 = scmp.eq.s32.totalorder %s202, 0
  %p204 = pneg %p203
  %206 = shalt.err (%p204)

</llo_original>
